<compile_context>
chip_gen: v6e
topology: v6e:2x2x1
jax: 0.10.0
libtpu: 0.0.40
codegen_flags: <defaults>
</compile_context>

<pallas_src>
import jax
import jax.numpy as jnp
from jax.experimental import pallas as pl
from jax.experimental.pallas import tpu as pltpu


def _cin_kernel(inf_ref, base_ref, w_ref, bias_ref, out_ref):
    # inf_ref : (indim,     TN)  current lane block, compute dtype (bf16 or f32)
    # base_ref: (basedim_p, TN)  basedim_p % 8 == 0 (padded rows are zero)
    # w_ref   : (outdim, indim*basedim_p)  resident (constant index_map)
    # bias_ref: (outdim, 1) f32            resident
    # out_ref : (outdim, TN)
    inf = inf_ref[...]
    bas = base_ref[...]
    indim, tn = inf.shape
    basedim_p = bas.shape[0]

    # Outer product over the two channel axes; basedim_p is a multiple of 8, so the
    # channel merge below is a pure sublane-aligned re-stack (no lane/sublane shuffles),
    # and the lane axis (TN) is untouched.
    z = (inf[:, None, :] * bas[None, :, :]).reshape(indim * basedim_p, tn)

    # 1x1 conv == a single lane-dense MXU matmul with f32 accumulation.
    acc = jnp.dot(w_ref[...], z, preferred_element_type=jnp.float32)
    out_ref[...] = (acc + bias_ref[...]).astype(out_ref.dtype)


def _choose_lane_block(n, per_lane_bytes, max_block=2048):
    """Pick the lane-block width TN (multiple of 128).

    Capped so the per-step z tile (and friends) stays within ~8 MiB of VMEM; prefers
    >= 2 grid steps when the extent allows so the 'parallel' grid axis can be sharded
    across v7x's two TensorCores."""
    n_pad = -(-n // 128) * 128
    cap = max(128, ((8 << 20) // max(per_lane_bytes, 1)) // 128 * 128)
    tn = min(max_block, cap, n_pad)
    tn = max(128, tn // 128 * 128)
    if n_pad // tn < 2 and n_pad >= 256:
        tn = max(128, (n_pad // 2) // 128 * 128)
    return tn


def cin_comp(infeature, base, weight, bias, *, compute_dtype=jnp.bfloat16,
             max_lane_block=2048):
    """infeature: (B, indim, D); base: (B, basedim, D);
    weight: (outdim, indim*basedim); bias: (outdim,) -> out (B, outdim, D)."""
    B, indim, D = infeature.shape
    basedim = base.shape[1]
    outdim, C = weight.shape
    assert C == indim * basedim
    out_dtype = infeature.dtype

    # Pad basedim to a multiple of 8 so the in-kernel channel merge is free
    # (sublane-aligned); the padded base rows are zero so they contribute nothing.
    basedim_p = -(-basedim // 8) * 8
    C_p = indim * basedim_p

    # Layout plumbing (outside the kernel): channels-first, flatten (B, D) onto the
    # lane axis, cast HBM traffic to the compute dtype (default bf16).
    inf_t = jnp.transpose(infeature, (1, 0, 2)).reshape(indim, B * D).astype(compute_dtype)
    base_t = jnp.transpose(base, (1, 0, 2)).reshape(basedim, B * D).astype(compute_dtype)
    if basedim_p != basedim:
        base_t = jnp.pad(base_t, ((0, basedim_p - basedim), (0, 0)))
        w = jnp.pad(weight.reshape(outdim, indim, basedim),
                    ((0, 0), (0, 0), (0, basedim_p - basedim))).reshape(outdim, C_p)
    else:
        w = weight
    w = w.astype(compute_dtype)
    bias2d = bias.reshape(outdim, 1).astype(jnp.float32)

    in_b = jnp.dtype(compute_dtype).itemsize
    out_b = jnp.dtype(out_dtype).itemsize

    N = B * D
    TN = _choose_lane_block(N, per_lane_bytes=2 * C_p * in_b, max_block=max_lane_block)
    grid_n = -(-N // TN)
    N_pad = grid_n * TN
    if N_pad != N:
        inf_t = jnp.pad(inf_t, ((0, 0), (0, N_pad - N)))
        base_t = jnp.pad(base_t, ((0, 0), (0, N_pad - N)))

    # Explicit VMEM budget: double-buffered I/O tiles + resident W/bias + f32 temps.
    needed = (2 * (indim + basedim_p) * TN * in_b       # double-buffered input tiles
              + 2 * outdim * TN * out_b                 # double-buffered output tile
              + outdim * C_p * in_b + outdim * 4        # resident W + bias
              + 2 * C_p * TN * in_b                     # outer-product / z tiles
              + outdim * TN * 4)                        # f32 accumulator
    vmem_limit = int(min(64 * 2**20, max(2 * needed, 32 * 2**20)))

    # TODO(synk): for very large C = indim*basedim, add a K grid axis ("arbitrary",
    # last) with a pltpu.VMEM accumulator instead of keeping all of W resident.
    out_flat = pl.pallas_call(
        _cin_kernel,
        out_shape=jax.ShapeDtypeStruct((outdim, N_pad), out_dtype),
        grid_spec=pltpu.PrefetchScalarGridSpec(
            num_scalar_prefetch=0,
            grid=(grid_n,),
            in_specs=[
                pl.BlockSpec((indim, TN), lambda n: (0, n)),
                pl.BlockSpec((basedim_p, TN), lambda n: (0, n)),
                pl.BlockSpec((outdim, C_p), lambda n: (0, 0)),   # resident weight
                pl.BlockSpec((outdim, 1), lambda n: (0, 0)),     # resident bias
            ],
            out_specs=pl.BlockSpec((outdim, TN), lambda n: (0, n)),
        ),
        compiler_params=pltpu.CompilerParams(
            dimension_semantics=("parallel",),
            vmem_limit_bytes=vmem_limit),
    )(inf_t, base_t, w, bias2d)

    out_flat = out_flat[:, :N]
    return jnp.transpose(out_flat.reshape(outdim, B, D), (1, 0, 2))


def cin_comp_ref(infeature, base, weight, bias):
    # Pure-JAX reference of the PyTorch forward.
    B, indim, D = infeature.shape
    basedim = base.shape[1]
    z = (infeature[:, :, None, :] * base[:, None, :, :]).reshape(B, indim * basedim, D)
    return jnp.einsum("oc,bcd->bod", weight, z) + bias[None, :, None]


if __name__ == "__main__":
    def make_inputs(key, B, indim, basedim, D, outdim, w_scale=0.1):
        k1, k2, k3, k4 = jax.random.split(key, 4)
        infeature = jax.random.normal(k1, (B, indim, D), dtype=jnp.float32)
        base = jax.random.normal(k2, (B, basedim, D), dtype=jnp.float32)
        weight = w_scale * jax.random.normal(k3, (outdim, indim * basedim), dtype=jnp.float32)
        bias = w_scale * jax.random.normal(k4, (outdim,), dtype=jnp.float32)
        return infeature, base, weight, bias

    key = jax.random.PRNGKey(0)
    k_a, k_b, k_c = jax.random.split(key, 3)

    # Case 1: toy shape implied by the module (basedim = len(feature_stastic) - 1 = 4).
    # B*D = 64 -> padded to one 128-lane block. Exact f32 path, tight tolerance.
    inf1, base1, w1, b1 = make_inputs(k_a, B=2, indim=4, basedim=4, D=32, outdim=8)
    out1 = jax.block_until_ready(cin_comp(inf1, base1, w1, b1, compute_dtype=jnp.float32))
    ref1 = cin_comp_ref(inf1, base1, w1, b1)
    assert out1.shape == (2, 8, 32)
    assert jnp.allclose(out1, ref1, atol=1e-4, rtol=1e-4), "f32 mismatch vs reference"

    # Case 2: lane-dense multi-step grid (B*D = 512 -> TN = 256, 2 parallel steps),
    # bf16 HBM traffic with f32 MXU accumulation.
    inf2, base2, w2, b2 = make_inputs(k_b, B=8, indim=4, basedim=4, D=64, outdim=8)
    out2 = jax.block_until_ready(cin_comp(inf2, base2, w2, b2, compute_dtype=jnp.bfloat16))
    ref2 = cin_comp_ref(inf2, base2, w2, b2)
    assert out2.shape == (8, 8, 64)
    assert jnp.allclose(out2.astype(jnp.float32), ref2, atol=5e-2, rtol=5e-2), \
        "bf16 mismatch vs reference"

    # Case 3: exercises the basedim padding path (22 -> 24) with larger channel dims;
    # f32 compute so the channel-padding logic is checked exactly.
    inf3, base3, w3, b3 = make_inputs(k_c, B=32, indim=16, basedim=22, D=16, outdim=32,
                                      w_scale=0.05)
    out3 = jax.block_until_ready(cin_comp(inf3, base3, w3, b3, compute_dtype=jnp.float32))
    ref3 = cin_comp_ref(inf3, base3, w3, b3)
    assert out3.shape == (32, 32, 16)
    assert jnp.allclose(out3, ref3, atol=1e-3, rtol=1e-3), "padded-channel mismatch vs reference"

    print("KERNEL_OK")
</pallas_src>

<mosaic_0001>
module attributes {stable_mosaic.version = 11 : i64} {
  func.func @_cin_kernel(%arg0: i32, %arg1: memref<4x128xf32, #tpu.memory_space<vmem>>, %arg2: memref<8x128xf32, #tpu.memory_space<vmem>>, %arg3: memref<8x32xf32, #tpu.memory_space<vmem>>, %arg4: memref<8x1xf32, #tpu.memory_space<vmem>>, %arg5: memref<8x128xf32, #tpu.memory_space<vmem>>) attributes {dimension_semantics = [#tpu.dimension_semantics<parallel>], iteration_bounds = array<i64: 1>, scalar_prefetch = 0 : i64, scratch_operands = 0 : i64, tpu.core_type = #tpu.core_type<tc>, window_params = [{transform_indices = @transform_0, window_bounds = array<i64: 4, 128>}, {transform_indices = @transform_1, window_bounds = array<i64: 8, 128>}, {pipeline_mode = #tpu.pipeline_mode<synchronous>, transform_indices = @transform_2, window_bounds = array<i64: 8, 32>}, {pipeline_mode = #tpu.pipeline_mode<synchronous>, transform_indices = @transform_3, window_bounds = array<i64: 8, 1>}, {transform_indices = @transform_4, window_bounds = array<i64: 8, 128>}]} {
    %c0 = arith.constant 0 : index
    %c0_0 = arith.constant 0 : index
    %0 = vector.load %arg1[%c0, %c0_0] : memref<4x128xf32, #tpu.memory_space<vmem>>, vector<4x128xf32>
    %c0_1 = arith.constant 0 : index
    %c0_2 = arith.constant 0 : index
    %1 = vector.load %arg2[%c0_1, %c0_2] : memref<8x128xf32, #tpu.memory_space<vmem>>, vector<8x128xf32>
    %2 = vector.shape_cast %0 : vector<4x128xf32> to vector<4x1x128xf32>
    %3 = vector.shape_cast %1 : vector<8x128xf32> to vector<1x8x128xf32>
    %4 = vector.broadcast %2 : vector<4x1x128xf32> to vector<4x8x128xf32>
    %5 = vector.broadcast %3 : vector<1x8x128xf32> to vector<4x8x128xf32>
    %6 = arith.mulf %4, %5 : vector<4x8x128xf32>
    %7 = vector.shape_cast %6 : vector<4x8x128xf32> to vector<32x128xf32>
    %c0_3 = arith.constant 0 : index
    %c0_4 = arith.constant 0 : index
    %8 = vector.load %arg3[%c0_3, %c0_4] : memref<8x32xf32, #tpu.memory_space<vmem>>, vector<8x32xf32>
    %cst = arith.constant dense<0.000000e+00> : vector<8x128xf32>
    %9 = tpu.matmul %8, %7, %cst {dimension_numbers = #tpu.dot_dimension_numbers<[1], [0], [0], [1], [0, 0, 1, 1], [], []>} : vector<8x32xf32>, vector<32x128xf32>, vector<8x128xf32> -> vector<8x128xf32>
    %c0_5 = arith.constant 0 : index
    %c0_6 = arith.constant 0 : index
    %10 = vector.load %arg4[%c0_5, %c0_6] : memref<8x1xf32, #tpu.memory_space<vmem>>, vector<8x1xf32>
    %11 = vector.broadcast %10 : vector<8x1xf32> to vector<8x128xf32>
    %12 = arith.addf %9, %11 : vector<8x128xf32>
    %c0_7 = arith.constant 0 : index
    %c0_8 = arith.constant 0 : index
    %13 = vector.load %arg5[%c0_7, %c0_8] : memref<8x128xf32, #tpu.memory_space<vmem>>, vector<8x128xf32>
    tpu.vector_store %arg5[%c0_7, %c0_8], %12 {strides = array<i32>} : memref<8x128xf32, #tpu.memory_space<vmem>>, vector<8x128xf32>,
    return
  }
  func.func @transform_0(%arg0: i32) -> (i32, i32) {
    %c0_i32 = arith.constant 0 : i32
    %c0_i32_0 = arith.constant 0 : i32
    return %c0_i32, %arg0 : i32, i32
  }
  func.func @transform_1(%arg0: i32) -> (i32, i32) {
    %c0_i32 = arith.constant 0 : i32
    %c0_i32_0 = arith.constant 0 : i32
    return %c0_i32, %arg0 : i32, i32
  }
  func.func @transform_2(%arg0: i32) -> (i32, i32) {
    %c0_i32 = arith.constant 0 : i32
    %c0_i32_0 = arith.constant 0 : i32
    %c0_i32_1 = arith.constant 0 : i32
    return %c0_i32, %c0_i32_0 : i32, i32
  }
  func.func @transform_3(%arg0: i32) -> (i32, i32) {
    %c0_i32 = arith.constant 0 : i32
    %c0_i32_0 = arith.constant 0 : i32
    %c0_i32_1 = arith.constant 0 : i32
    return %c0_i32, %c0_i32_0 : i32, i32
  }
  func.func @transform_4(%arg0: i32) -> (i32, i32) {
    %c0_i32 = arith.constant 0 : i32
    %c0_i32_0 = arith.constant 0 : i32
    return %c0_i32, %arg0 : i32, i32
  }
}

</mosaic_0001>

<llo_original>
// kernel: tpu_custom_call.1
$region0: #{tpu_custom_call.1}
  #allocation0 [shape = 'u32[]', space=smem, size = 0x4, offset = 0x4, fixed_abs, tag = 'smem constant byte address 0x4 - core index']
  #allocation1 [shape = 'u32[144,128]{1,0:T(1,128)}', space=vmem, size = 0x12000, scoped, tag = 'internal scratch']
  %s0 = inlined_call_operand.hbm [shape: f32[4,128], index: 0, kind: input, shape index: {}]
  %s1 = inlined_call_operand.vmem [shape: f32[8,128], index: 1, kind: input, shape index: {}]
  %s2 = inlined_call_operand.hbm [shape: f32[8,32], index: 2, kind: input, shape index: {}]
  %s3 = inlined_call_operand.vmem [shape: f32[8,1], index: 3, kind: input, shape index: {}]
  %s4 = inlined_call_operand.hbm [shape: f32[8,128], index: 4, kind: output, shape index: {}]
  %s5 = sld [smem:[#allocation0]]
  $region34: #{tpu_custom_call.1} parent=0
    _
  %s7 = ssub.s32 1, %s5
  %s8 = scalar_select 0, %s7, %s5
  $region1: #{tpu_custom_call.1} parent=0
    #allocation2 [shape = 'u8[2048]{0}', space=vmem, size = 0x800, scoped, tag = 'input window, operand 0, single buffered']
    #allocation3 [shape = 's32[1]{0}', space=sflag, size = 0x4, scoped, tag = 'scoped memory for tpu_custom_call.1']
    #allocation4 [shape = 's32[1]{0}', space=sflag, size = 0x4, scoped, tag = 'scoped memory for tpu_custom_call.1']
    #allocation5 [shape = 'u8[4096]{0}', space=vmem, size = 0x1000, scoped, tag = 'input window, operand 2, single buffered']
    #allocation6 [shape = 's32[1]{0}', space=sflag, size = 0x4, scoped, tag = 'scoped memory for tpu_custom_call.1']
    #allocation7 [shape = 'u8[4096]{0}', space=vmem, size = 0x1000, scoped, tag = 'output window, operand 0, single buffered']
    %9 = vsyncpa [#allocation3], 0
    %10 = vsyncpa [#allocation6], 0
    %11 = vsyncpa [#allocation4], 0
    // Predicated region
    $region2: #{tpu_custom_call.1} parent=1 // pred_check
      _
    $region3: #{tpu_custom_call.1} parent=1 // pred_check_branch
      %13 = sbr.rel (0) target = $region5
    $region4: #{tpu_custom_call.1} parent=1 // pred_region
      %s15 = ssub.s32 64, 64
      %16 = vsyncadd [#allocation3], %s15
      %s18 = sshll.u32 [#allocation2], 4
      %s19 = int_to_ptr.vmem [resolvable:$true] %s18
      %21 = dma.hbm_to_vmem [thread:$0]  %s0, 64, %s19, [#allocation3]
    $region5: #{tpu_custom_call.1} parent=1 // pred_fallthru
      _
    // Predicated region
    $region6: #{tpu_custom_call.1} parent=1 // pred_check
      _
    $region7: #{tpu_custom_call.1} parent=1 // pred_check_branch
      %23 = sbr.rel (0) target = $region9
    $region8: #{tpu_custom_call.1} parent=1 // pred_region
      _
    $region9: #{tpu_custom_call.1} parent=1 // pred_fallthru
      _
    // Predicated region
    $region10: #{tpu_custom_call.1} parent=1 // pred_check
      _
    $region11: #{tpu_custom_call.1} parent=1 // pred_check_branch
      %25 = sbr.rel (0) target = $region13
    $region12: #{tpu_custom_call.1} parent=1 // pred_region
      %s27 = ssub.s32 128, 128
      %28 = vsyncadd [#allocation6], %s27
      %s30 = sshll.u32 [#allocation5], 4
      %s31 = int_to_ptr.vmem [resolvable:$true] %s30
      %33 = dma.hbm_to_vmem [thread:$0]  %s2, 128, %s31, [#allocation6]
    $region13: #{tpu_custom_call.1} parent=1 // pred_fallthru
      _
    // Predicated region
    $region14: #{tpu_custom_call.1} parent=1 // pred_check
      _
    $region15: #{tpu_custom_call.1} parent=1 // pred_check_branch
      %35 = sbr.rel (0) target = $region17
    $region16: #{tpu_custom_call.1} parent=1 // pred_region
      _
    $region17: #{tpu_custom_call.1} parent=1 // pred_fallthru
      _
    // Predicated region
    $region18: #{tpu_custom_call.1} parent=1 // pred_check
      _
    $region19: #{tpu_custom_call.1} parent=1 // pred_check_branch
      %37 = sbr.rel (0) target = $region21
    $region20: #{tpu_custom_call.1} parent=1 // pred_region
      %38 = dma.done [#allocation3], 64
    $region21: #{tpu_custom_call.1} parent=1 // pred_fallthru
      _
    // Predicated region
    $region22: #{tpu_custom_call.1} parent=1 // pred_check
      _
    $region23: #{tpu_custom_call.1} parent=1 // pred_check_branch
      %40 = sbr.rel (0) target = $region25
    $region24: #{tpu_custom_call.1} parent=1 // pred_region
      %41 = dma.done [#allocation6], 128
    $region25: #{tpu_custom_call.1} parent=1 // pred_fallthru
      _
    %v42 = vld [vmem:[#allocation2] sm:$0xf]
    %v43 = vld [vmem:[%s1] sm:$0xff]
    %v46 = vunpack.c.l.s4 1966171168
    %v47 = vunpack.c.0.s8 %v46
    %v48 = vlaneseq
    %v49 = vshrl.u32 %v48, 7
    %v50 = vsub.s32 %v47, %v49
    %v51 = vrot.slane %v42, %v50
    %v52 = vcombine.high %v51, %v51
    %v54 = vunpack.c.l.s4 1966171168
    %v55 = vunpack.c.0.s8 %v54
    %v56 = vlaneseq
    %v57 = vshrl.u32 %v56, 7
    %v58 = vsub.s32 %v55, %v57
    %v59 = vrot.slane %v51, %v58
    %v61 = vunpack.c.l.s4 1966171168
    %v62 = vunpack.c.0.s8 %v61
    %v63 = vlaneseq
    %v64 = vshrl.u32 %v63, 7
    %v65 = vsub.s32 %v62, %v64
    %v66 = vrot.slane %v52, %v65
    %v67 = vcombine.high %v59, %v59
    %v68 = vcombine.high %v66, %v66
    %v69 = vlaneseq
    %v70 = vshrl.u32 %v69, 7
    %v71 = vsub.s32 0, %v70
    %v72 = vrot.slane %v59, %v71
    %v73 = vlaneseq
    %v74 = vshrl.u32 %v73, 7
    %v75 = vsub.s32 0, %v74
    %v76 = vrot.slane %v66, %v75
    %v77 = vlaneseq
    %v78 = vshrl.u32 %v77, 7
    %v79 = vsub.s32 0, %v78
    %v80 = vrot.slane %v67, %v79
    %v81 = vlaneseq
    %v82 = vshrl.u32 %v81, 7
    %v83 = vsub.s32 0, %v82
    %v84 = vrot.slane %v68, %v83
    %v89 = vmul.f32 %v72, %v43
    %v90 = vmul.f32 %v76, %v43
    %v91 = vmul.f32 %v80, %v43
    %v92 = vmul.f32 %v84, %v43
    %v93 = vld [vmem:[#allocation5] sm:$0xff]
    %v94 = vld [vmem:[%s3] sm:$0xff]
    %96 = vset.pattern.permute.xlu0 0
    %97 = vperm.xlu0 %96, %v94
    %v98 = vpop.permute.xlu0 %97
    %vm100 = vcmask 261120
    %v102 = vsel %vm100, %v93, 0
    %104 = vmatprep.subr.mxu0 0.0
    %105 = vmatpush1.msra.mxu0 0.0
    %106 = vmatprep.subr.mxu0 0.0
    %107 = vmatpush1.msra.mxu0 0.0
    %108 = vmatprep.subr.mxu0 0.0
    %109 = vmatpush1.msra.mxu0 0.0
    %110 = vmatprep.subr.mxu0 0.0
    %111 = vmatpush1.msra.mxu0 0.0
    %112 = vmatprep.subr.mxu0 0.0
    %113 = vmatpush1.msra.mxu0 0.0
    %114 = vmatprep.subr.mxu0 0.0
    %115 = vmatpush1.msra.mxu0 0.0
    %116 = vmatprep.subr.mxu0 0.0
    %117 = vmatpush1.msra.mxu0 0.0
    %118 = vmatprep.subr.mxu0 0.0
    %119 = vmatpush1.msra.mxu0 0.0
    %120 = vmatprep.subr.mxu0 0.0
    %121 = vmatpush1.msra.mxu0 0.0
    %122 = vmatprep.subr.mxu0 0.0
    %123 = vmatpush1.msra.mxu0 0.0
    %124 = vmatprep.subr.mxu0 0.0
    %125 = vmatpush1.msra.mxu0 0.0
    %126 = vmatprep.subr.mxu0 0.0
    %127 = vmatpush1.msra.mxu0 0.0
    %128 = vmatprep.subr.mxu0 0.0
    %129 = vmatpush1.msra.mxu0 %v92
    %130 = vmatprep.subr.mxu0 0.0
    %131 = vmatpush1.msra.mxu0 %v91
    %132 = vmatprep.subr.mxu0 0.0
    %133 = vmatpush1.msra.mxu0 %v90
    %134 = vmatprep.subr.mxu0 0.0
    %135 = vmatpush1.msra.mxu0 %v89
    %136 = vmatprep.subr.mxu0 0.0
    %137 = vmatpush2.msra.mxu0 0.0
    %138 = vmatprep.subr.mxu0 0.0
    %139 = vmatpush2.msra.mxu0 0.0
    %140 = vmatprep.subr.mxu0 0.0
    %141 = vmatpush2.msra.mxu0 0.0
    %142 = vmatprep.subr.mxu0 0.0
    %143 = vmatpush2.msra.mxu0 0.0
    %144 = vmatprep.subr.mxu0 0.0
    %145 = vmatpush2.msra.mxu0 0.0
    %146 = vmatprep.subr.mxu0 0.0
    %147 = vmatpush2.msra.mxu0 0.0
    %148 = vmatprep.subr.mxu0 0.0
    %149 = vmatpush2.msra.mxu0 0.0
    %150 = vmatprep.subr.mxu0 0.0
    %151 = vmatpush2.msra.mxu0 0.0
    %152 = vmatprep.subr.mxu0 0.0
    %153 = vmatpush2.msra.mxu0 0.0
    %154 = vmatprep.subr.mxu0 0.0
    %155 = vmatpush2.msra.mxu0 0.0
    %156 = vmatprep.subr.mxu0 0.0
    %157 = vmatpush2.msra.mxu0 0.0
    %158 = vmatprep.subr.mxu0 0.0
    %159 = vmatpush2.msra.mxu0 0.0
    %160 = vmatprep.subr.mxu0 0.0
    %161 = vmatpush2.msra.mxu0 0.0
    %162 = vmatprep.subr.mxu0 0.0
    %163 = vmatpush2.msra.mxu0 0.0
    %164 = vmatprep.subr.mxu0 0.0
    %165 = vmatpush2.msra.mxu0 0.0
    %166 = vmatprep.subr.mxu0 0.0
    %167 = vmatpush2.msra.mxu0 0.0
    %168 = vmatprep.mubr.f32.mxu0 0.0
    %169 = vmatmul.mubr.f32.gmra.mxu0 %v102
    %v170 = vpop.f32.mrf.mxu0
    %v171 = vadd.f32 %v98, %v170
    %v172 = vpop.f32.mrf.mxu0
    %173 = vdwg.mxu0
    %174 = vst [vmem:[#allocation7] sm:$0xff] %v171
    // Predicated region
    $region26: #{tpu_custom_call.1} parent=1 // pred_check
      _
    $region27: #{tpu_custom_call.1} parent=1 // pred_check_branch
      %176 = sbr.rel (0) target = $region29
    $region28: #{tpu_custom_call.1} parent=1 // pred_region
      %s178 = ssub.s32 128, 128
      %179 = vsyncadd [#allocation4], %s178
      %s181 = sshll.u32 [#allocation7], 4
      %s182 = int_to_ptr.vmem [resolvable:$true] %s181
      %184 = dma.vmem_to_hbm [thread:$0]  %s182, 128, %s4, [#allocation4]
    $region29: #{tpu_custom_call.1} parent=1 // pred_fallthru
      _
    // Predicated region
    $region30: #{tpu_custom_call.1} parent=1 // pred_check
      _
    $region31: #{tpu_custom_call.1} parent=1 // pred_check_branch
      %186 = sbr.rel (0) target = $region33
    $region32: #{tpu_custom_call.1} parent=1 // pred_region
      %187 = dma.done [#allocation4], 128
    $region33: #{tpu_custom_call.1} parent=1 // pred_fallthru
      _
    %188 = vsyncpa [#allocation3], 1
    %189 = vsyncpa [#allocation6], 1
    %190 = vsyncpa [#allocation4], 1

</llo_original>
